<compile_context>
chip_gen: v7x
topology: tpu7x:2x2x1
jax: 0.10.0
libtpu: 0.0.40
codegen_flags: <defaults>
</compile_context>

<pallas_src>
import functools

import jax
import jax.numpy as jnp
from jax.experimental import pallas as pl
from jax.experimental.pallas import tpu as pltpu

EPS = 1e-5

# Conservative VMEM budgets so the same tiling is safe on v7x (64 MiB physical VMEM) as well as
# v5e/v6e (128 MiB).
VMEM_LIMIT = 48 * 1024 * 1024        # scoped limit handed to Mosaic
Y_CACHE_BUDGET = 32 * 1024 * 1024    # cache y in VMEM only when it fits this budget
TILE_BUF_BUDGET = 12 * 1024 * 1024   # double-buffered (patches + out) tile budget


def _round_up(x, m):
    return (x + m - 1) // m * m


def _im2col_kxm(x, kh, kw, stride, padding, dilation):
    """Extract conv patches in M-as-lane layout.

    x: (N, C, H, W) (already bf16) -> (K, M) with K = C*kh*kw ordered (C, kh, kw)
    (matching PyTorch weight.reshape(C_out, C_in*kh*kw)) and M = N*OH*OW ordered (N, OH, OW).
    """
    # TODO(synk): a fully implicit-GEMM kernel (DMA input tile + halo, loop over kh*kw) would
    # remove the kh*kw im2col HBM blow-up entirely; here the expansion at least stays in bf16.
    N, C, H, W = x.shape
    xp = jnp.pad(x, ((0, 0), (0, 0), (padding, padding), (padding, padding)))
    OH = (H + 2 * padding - dilation * (kh - 1) - 1) // stride + 1
    OW = (W + 2 * padding - dilation * (kw - 1) - 1) // stride + 1
    cols = []
    for i in range(kh):
        for j in range(kw):
            r0 = i * dilation
            c0 = j * dilation
            cols.append(xp[:, :, r0:r0 + stride * OH:stride, c0:c0 + stride * OW:stride])
    col = jnp.stack(cols, axis=2)                      # (N, C, kh*kw, OH, OW)
    col = col.reshape(N, C * kh * kw, OH, OW)          # K ordered (C, kh, kw)
    col = col.transpose(1, 0, 2, 3).reshape(C * kh * kw, N * OH * OW)   # (K, M)
    return col, OH, OW


# ------------------------------ fused conv + BN-stats + BN-apply + ReLU ------------------------
def _fused_kernel(gamma_ref, beta_ref, p_ref, w_ref, o_ref,
                  sum_ref, ssum_ref, scale_ref, shift_ref, *y_cache,
                  inv_m, use_cache):
    """grid = (2, num_tiles). phase 0: accumulate exact global per-channel sum / sum-of-squares
    of y = W @ patches (optionally caching y in VMEM). phase boundary: fold BN into one FMA.
    phase 1: out = relu(y * scale + shift), stored lane-dense along M."""
    phase = pl.program_id(0)
    t = pl.program_id(1)
    tm = o_ref.shape[1]

    @pl.when(jnp.logical_and(phase == 0, t == 0))
    def _init():
        sum_ref[...] = jnp.zeros_like(sum_ref)
        ssum_ref[...] = jnp.zeros_like(ssum_ref)

    @pl.when(phase == 0)
    def _stats():
        # bf16 operands, f32 accumulation on the MXU. Zero-padded M columns contribute 0.
        y = jnp.dot(w_ref[...], p_ref[...], preferred_element_type=jnp.float32)  # (C8, tm) f32
        sum_ref[...] += jnp.sum(y, axis=1, keepdims=True)       # (C8, 1)
        ssum_ref[...] += jnp.sum(y * y, axis=1, keepdims=True)  # (C8, 1)
        if use_cache:
            off = pl.multiple_of(t * tm, tm)
            y_cache[0][:, pl.ds(off, tm)] = y

    @pl.when(jnp.logical_and(phase == 1, t == 0))
    def _fold():
        # Biased variance (training-mode batch_norm). f32 throughout.
        mean = sum_ref[...] * inv_m
        var = ssum_ref[...] * inv_m - mean * mean
        inv_std = jax.lax.rsqrt(var + EPS)
        scale = gamma_ref[...] * inv_std
        scale_ref[...] = scale
        shift_ref[...] = beta_ref[...] - mean * scale

    @pl.when(phase == 1)
    def _apply():
        if use_cache:
            off = pl.multiple_of(t * tm, tm)
            y = y_cache[0][:, pl.ds(off, tm)]
        else:
            y = jnp.dot(w_ref[...], p_ref[...], preferred_element_type=jnp.float32)
        o_ref[...] = jnp.maximum(y * scale_ref[...] + shift_ref[...], 0.0).astype(o_ref.dtype)


@functools.partial(jax.jit,
                   static_argnames=("stride", "padding", "dilation", "tile_m", "out_dtype"))
def conv_bn_relu(x_nchw, weight, gamma, beta, *, stride, padding, dilation,
                 tile_m=2048, out_dtype=jnp.float32):
    """x_nchw: (N, C_in, H, W); weight: (C_out, C_in, kh, kw); gamma, beta: (C_out,)."""
    c_out, c_in, kh, kw = weight.shape
    N = x_nchw.shape[0]

    # im2col entirely in bf16; patches laid out (K, M) so M is the lane dimension.
    patches, OH, OW = _im2col_kxm(x_nchw.astype(jnp.bfloat16), kh, kw, stride, padding, dilation)
    K, M = patches.shape

    # Channel padding only to a sublane multiple (8); lane dim is M.
    c_pad = _round_up(c_out, 8)

    # Tile size along M: as big as possible (mem-bound), clamped so double-buffered tiles fit
    # a conservative VMEM budget, and always a multiple of 128 (lane-dense blocks).
    bytes_per_m = K * 2 + c_pad * 4                       # bf16 patches + f32/bf16 out per column
    tm_cap = max(128, (TILE_BUF_BUDGET // (2 * bytes_per_m)) // 128 * 128)
    tm = min(_round_up(tile_m, 128), tm_cap, _round_up(M, 128))
    M_pad = _round_up(M, tm)
    if M_pad != M:
        patches = jnp.pad(patches, ((0, 0), (0, M_pad - M)))
    num_tiles = M_pad // tm

    # Weights: (C_out, K) padded to (c_pad, K), bf16 for the MXU. Padded channels are zero ->
    # zero conv output, gamma_pad=0 -> scale=0, shift=0 -> zero output rows (sliced off below).
    w_mat = weight.reshape(c_out, c_in * kh * kw).astype(jnp.bfloat16)
    w_pad = jnp.zeros((c_pad, K), jnp.bfloat16).at[:c_out, :].set(w_mat)
    gamma_p = jnp.zeros((c_pad, 1), jnp.float32).at[:c_out, 0].set(gamma.astype(jnp.float32))
    beta_p = jnp.zeros((c_pad, 1), jnp.float32).at[:c_out, 0].set(beta.astype(jnp.float32))

    # Generation-aware y-cache: reuse the f32 conv output from the stats phase when it fits VMEM
    # (threshold chosen to be safe under v7x's 64 MiB physical VMEM; v5e/v6e have 128 MiB).
    use_cache = (c_pad * M_pad * 4) <= Y_CACHE_BUDGET

    scratch = [pltpu.VMEM((c_pad, 1), jnp.float32) for _ in range(4)]  # sum, ssum, scale, shift
    if use_cache:
        scratch.append(pltpu.VMEM((c_pad, M_pad), jnp.float32))        # y cache
        # Phase 1 never reads patches: pin the block index so no re-DMA happens.
        p_map = lambda p, t: (0, t * (1 - p))
    else:
        p_map = lambda p, t: (0, t)

    kernel = functools.partial(_fused_kernel, inv_m=1.0 / M, use_cache=use_cache)

    out_flat = pl.pallas_call(
        kernel,
        out_shape=jax.ShapeDtypeStruct((c_pad, M_pad), out_dtype),
        grid_spec=pltpu.PrefetchScalarGridSpec(
            num_scalar_prefetch=0,
            grid=(2, num_tiles),                              # (phase, M tiles)
            in_specs=[pl.BlockSpec((c_pad, 1), lambda p, t: (0, 0)),   # gamma (resident)
                      pl.BlockSpec((c_pad, 1), lambda p, t: (0, 0)),   # beta  (resident)
                      pl.BlockSpec((K, tm), p_map),                    # patches tile
                      pl.BlockSpec((c_pad, K), lambda p, t: (0, 0))],  # weights (resident)
            # During phase 0 the output block index is pinned to 0 and never written, so no
            # garbage writeback happens; each block is written exactly once in phase 1.
            out_specs=pl.BlockSpec((c_pad, tm), lambda p, t: (0, t * p)),
            scratch_shapes=scratch),
        compiler_params=pltpu.CompilerParams(
            dimension_semantics=("arbitrary", "arbitrary"),   # phase 1 depends on all of phase 0
            vmem_limit_bytes=VMEM_LIMIT),
    )(gamma_p, beta_p, patches, w_pad)

    # (c_pad, M_pad) -> (c_out, M) -> (N, C_out, OH, OW)
    out = out_flat[:c_out, :M].reshape(c_out, N, OH, OW).transpose(1, 0, 2, 3)
    return out


def _reference(x_nchw, weight, gamma, beta, *, stride, padding, dilation,
               compute_dtype=jnp.float32):
    """Pure-JAX reference (lax conv + training-mode BN + ReLU)."""
    y = jax.lax.conv_general_dilated(
        x_nchw.astype(compute_dtype), weight.astype(compute_dtype),
        window_strides=(stride, stride),
        padding=[(padding, padding), (padding, padding)],
        rhs_dilation=(dilation, dilation),
        dimension_numbers=("NCHW", "OIHW", "NCHW"),
        preferred_element_type=jnp.float32,
    )
    mean = jnp.mean(y, axis=(0, 2, 3), keepdims=True)
    var = jnp.mean((y - mean) ** 2, axis=(0, 2, 3), keepdims=True)
    g = gamma.reshape(1, -1, 1, 1).astype(jnp.float32)
    b = beta.reshape(1, -1, 1, 1).astype(jnp.float32)
    out = (y - mean) * jax.lax.rsqrt(var + EPS) * g + b
    return jnp.maximum(out, 0.0)


if __name__ == "__main__":
    # Module config: ConvBNReLU(c_in=4, c_out=8, kernel_size=3, stride=1, padding=1, dilation=1)
    N, C_IN, H, W = 2, 4, 16, 16
    C_OUT, KH, KW = 8, 3, 3
    STRIDE, PADDING, DILATION = 1, 1, 1

    key = jax.random.PRNGKey(0)
    kx, kw_ = jax.random.split(key)
    x = jax.random.normal(kx, (N, C_IN, H, W), dtype=jnp.float32)
    # Conv2d(bias=False) weight; BN affine params per reset_parameters: gamma=1, beta=0.
    fan_in = C_IN * KH * KW
    conv_w = jax.random.normal(kw_, (C_OUT, C_IN, KH, KW), dtype=jnp.float32) / jnp.sqrt(fan_in)
    gamma = jnp.ones((C_OUT,), dtype=jnp.float32)
    beta = jnp.zeros((C_OUT,), dtype=jnp.float32)

    out = conv_bn_relu(x, conv_w, gamma, beta,
                       stride=STRIDE, padding=PADDING, dilation=DILATION)
    out = jax.block_until_ready(out)
    assert out.shape == (N, C_OUT, H, W), out.shape
    assert bool(jnp.all(jnp.isfinite(out)))

    # Strict check against a reference fed the same bf16-rounded operands (kernel uses bf16 MXU
    # inputs with f32 accumulation).
    ref_bf16 = _reference(x, conv_w, gamma, beta, stride=STRIDE, padding=PADDING,
                          dilation=DILATION, compute_dtype=jnp.bfloat16)
    err_strict = float(jnp.max(jnp.abs(out - ref_bf16)))
    assert jnp.allclose(out, ref_bf16, atol=5e-3, rtol=5e-3), err_strict

    # Loose check against the full-f32 PyTorch-equivalent forward (only deviation: bf16 operands).
    ref_f32 = _reference(x, conv_w, gamma, beta, stride=STRIDE, padding=PADDING,
                         dilation=DILATION, compute_dtype=jnp.float32)
    err_f32 = float(jnp.max(jnp.abs(out - ref_f32)))
    assert jnp.allclose(out, ref_f32, atol=6e-2, rtol=6e-2), err_f32

    print("KERNEL_OK")
</pallas_src>

<mosaic_0001>
module attributes {stable_mosaic.version = 11 : i64} {
  func.func @_fused_kernel(%arg0: i32, %arg1: i32, %arg2: memref<8x1xf32, #tpu.memory_space<vmem>>, %arg3: memref<8x1xf32, #tpu.memory_space<vmem>>, %arg4: memref<36x512xbf16, #tpu.memory_space<vmem>>, %arg5: memref<8x36xbf16, #tpu.memory_space<vmem>>, %arg6: memref<8x512xf32, #tpu.memory_space<vmem>>, %arg7: memref<8x1xf32, #tpu.memory_space<vmem>>, %arg8: memref<8x1xf32, #tpu.memory_space<vmem>>, %arg9: memref<8x1xf32, #tpu.memory_space<vmem>>, %arg10: memref<8x1xf32, #tpu.memory_space<vmem>>, %arg11: memref<8x512xf32, #tpu.memory_space<vmem>>) attributes {dimension_semantics = [#tpu.dimension_semantics<arbitrary>, #tpu.dimension_semantics<arbitrary>], iteration_bounds = array<i64: 2, 1>, scalar_prefetch = 0 : i64, scratch_operands = 5 : i64, tpu.core_type = #tpu.core_type<tc>, window_params = [{pipeline_mode = #tpu.pipeline_mode<synchronous>, transform_indices = @transform_0, window_bounds = array<i64: 8, 1>}, {pipeline_mode = #tpu.pipeline_mode<synchronous>, transform_indices = @transform_1, window_bounds = array<i64: 8, 1>}, {transform_indices = @transform_2, window_bounds = array<i64: 36, 512>}, {pipeline_mode = #tpu.pipeline_mode<synchronous>, transform_indices = @transform_3, window_bounds = array<i64: 8, 36>}, {transform_indices = @transform_4, window_bounds = array<i64: 8, 512>}]} {
    %c0_i32 = arith.constant 0 : i32
    %0 = arith.cmpi eq, %arg0, %c0_i32 : i32
    %c0_i32_0 = arith.constant 0 : i32
    %1 = arith.cmpi eq, %arg1, %c0_i32_0 : i32
    %2 = arith.andi %0, %1 : i1
    %3 = arith.extui %2 : i1 to i32
    %c0_i32_1 = arith.constant 0 : i32
    %4 = arith.cmpi ne, %3, %c0_i32_1 : i32
    scf.if %4 {
      %cst = arith.constant 0.000000e+00 : f32
      %16 = vector.broadcast %cst : f32 to vector<8x1xf32>
      %c0 = arith.constant 0 : index
      %c0_8 = arith.constant 0 : index
      %17 = vector.load %arg7[%c0, %c0_8] : memref<8x1xf32, #tpu.memory_space<vmem>>, vector<8x1xf32>
      tpu.vector_store %arg7[%c0, %c0_8], %16 {strides = array<i32>} : memref<8x1xf32, #tpu.memory_space<vmem>>, vector<8x1xf32>,
      %cst_9 = arith.constant 0.000000e+00 : f32
      %18 = vector.broadcast %cst_9 : f32 to vector<8x1xf32>
      %c0_10 = arith.constant 0 : index
      %c0_11 = arith.constant 0 : index
      %19 = vector.load %arg8[%c0_10, %c0_11] : memref<8x1xf32, #tpu.memory_space<vmem>>, vector<8x1xf32>
      tpu.vector_store %arg8[%c0_10, %c0_11], %18 {strides = array<i32>} : memref<8x1xf32, #tpu.memory_space<vmem>>, vector<8x1xf32>,
    } else {
    }
    %c0_i32_2 = arith.constant 0 : i32
    %5 = arith.cmpi eq, %arg0, %c0_i32_2 : i32
    %6 = arith.extui %5 : i1 to i32
    %c0_i32_3 = arith.constant 0 : i32
    %7 = arith.cmpi ne, %6, %c0_i32_3 : i32
    scf.if %7 {
      %c0 = arith.constant 0 : index
      %c0_8 = arith.constant 0 : index
      %16 = vector.load %arg5[%c0, %c0_8] : memref<8x36xbf16, #tpu.memory_space<vmem>>, vector<8x36xbf16>
      %c0_9 = arith.constant 0 : index
      %c0_10 = arith.constant 0 : index
      %17 = vector.load %arg4[%c0_9, %c0_10] : memref<36x512xbf16, #tpu.memory_space<vmem>>, vector<36x512xbf16>
      %cst = arith.constant dense<0.000000e+00> : vector<8x512xf32>
      %18 = tpu.matmul %16, %17, %cst {dimension_numbers = #tpu.dot_dimension_numbers<[1], [0], [0], [1], [0, 0, 1, 1], [], []>} : vector<8x36xbf16>, vector<36x512xbf16>, vector<8x512xf32> -> vector<8x512xf32>
      %c0_11 = arith.constant 0 : index
      %c0_12 = arith.constant 0 : index
      %19 = vector.load %arg7[%c0_11, %c0_12] : memref<8x1xf32, #tpu.memory_space<vmem>>, vector<8x1xf32>
      %cst_13 = arith.constant dense<0.000000e+00> : vector<8xf32>
      %20 = vector.multi_reduction <add>, %18, %cst_13 [1] : vector<8x512xf32> to vector<8xf32>
      %21 = vector.shape_cast %20 : vector<8xf32> to vector<8x1xf32>
      %22 = arith.addf %19, %21 : vector<8x1xf32>
      %c0_14 = arith.constant 0 : index
      %c0_15 = arith.constant 0 : index
      %23 = vector.load %arg7[%c0_14, %c0_15] : memref<8x1xf32, #tpu.memory_space<vmem>>, vector<8x1xf32>
      tpu.vector_store %arg7[%c0_14, %c0_15], %22 {strides = array<i32>} : memref<8x1xf32, #tpu.memory_space<vmem>>, vector<8x1xf32>,
      %c0_16 = arith.constant 0 : index
      %c0_17 = arith.constant 0 : index
      %24 = vector.load %arg8[%c0_16, %c0_17] : memref<8x1xf32, #tpu.memory_space<vmem>>, vector<8x1xf32>
      %25 = arith.mulf %18, %18 : vector<8x512xf32>
      %cst_18 = arith.constant dense<0.000000e+00> : vector<8xf32>
      %26 = vector.multi_reduction <add>, %25, %cst_18 [1] : vector<8x512xf32> to vector<8xf32>
      %27 = vector.shape_cast %26 : vector<8xf32> to vector<8x1xf32>
      %28 = arith.addf %24, %27 : vector<8x1xf32>
      %c0_19 = arith.constant 0 : index
      %c0_20 = arith.constant 0 : index
      %29 = vector.load %arg8[%c0_19, %c0_20] : memref<8x1xf32, #tpu.memory_space<vmem>>, vector<8x1xf32>
      tpu.vector_store %arg8[%c0_19, %c0_20], %28 {strides = array<i32>} : memref<8x1xf32, #tpu.memory_space<vmem>>, vector<8x1xf32>,
      %c512_i32 = arith.constant 512 : i32
      %30 = arith.muli %arg1, %c512_i32 : i32
      %31 = tpu.assume_multiple %30, 512 : i32
      %c0_21 = arith.constant 0 : index
      %32 = arith.index_cast %31 : i32 to index
      %33 = vector.load %arg11[%c0_21, %32] : memref<8x512xf32, #tpu.memory_space<vmem>>, vector<8x512xf32>
      tpu.vector_store %arg11[%c0_21, %32], %18 {strides = array<i32>} : memref<8x512xf32, #tpu.memory_space<vmem>>, vector<8x512xf32>,
    } else {
    }
    %c1_i32 = arith.constant 1 : i32
    %8 = arith.cmpi eq, %arg0, %c1_i32 : i32
    %c0_i32_4 = arith.constant 0 : i32
    %9 = arith.cmpi eq, %arg1, %c0_i32_4 : i32
    %10 = arith.andi %8, %9 : i1
    %11 = arith.extui %10 : i1 to i32
    %c0_i32_5 = arith.constant 0 : i32
    %12 = arith.cmpi ne, %11, %c0_i32_5 : i32
    scf.if %12 {
      %c0 = arith.constant 0 : index
      %c0_8 = arith.constant 0 : index
      %16 = vector.load %arg7[%c0, %c0_8] : memref<8x1xf32, #tpu.memory_space<vmem>>, vector<8x1xf32>
      %cst = arith.constant 0.001953125 : f32
      %17 = vector.broadcast %cst : f32 to vector<8x1xf32>
      %18 = arith.mulf %16, %17 : vector<8x1xf32>
      %c0_9 = arith.constant 0 : index
      %c0_10 = arith.constant 0 : index
      %19 = vector.load %arg8[%c0_9, %c0_10] : memref<8x1xf32, #tpu.memory_space<vmem>>, vector<8x1xf32>
      %cst_11 = arith.constant 0.001953125 : f32
      %20 = vector.broadcast %cst_11 : f32 to vector<8x1xf32>
      %21 = arith.mulf %19, %20 : vector<8x1xf32>
      %22 = arith.mulf %18, %18 : vector<8x1xf32>
      %23 = arith.subf %21, %22 : vector<8x1xf32>
      %cst_12 = arith.constant 9.99999974E-6 : f32
      %24 = vector.broadcast %cst_12 : f32 to vector<8x1xf32>
      %25 = arith.addf %23, %24 : vector<8x1xf32>
      %26 = math.rsqrt %25 : vector<8x1xf32>
      %c0_13 = arith.constant 0 : index
      %c0_14 = arith.constant 0 : index
      %27 = vector.load %arg2[%c0_13, %c0_14] : memref<8x1xf32, #tpu.memory_space<vmem>>, vector<8x1xf32>
      %28 = arith.mulf %27, %26 : vector<8x1xf32>
      %c0_15 = arith.constant 0 : index
      %c0_16 = arith.constant 0 : index
      %29 = vector.load %arg9[%c0_15, %c0_16] : memref<8x1xf32, #tpu.memory_space<vmem>>, vector<8x1xf32>
      tpu.vector_store %arg9[%c0_15, %c0_16], %28 {strides = array<i32>} : memref<8x1xf32, #tpu.memory_space<vmem>>, vector<8x1xf32>,
      %c0_17 = arith.constant 0 : index
      %c0_18 = arith.constant 0 : index
      %30 = vector.load %arg3[%c0_17, %c0_18] : memref<8x1xf32, #tpu.memory_space<vmem>>, vector<8x1xf32>
      %31 = arith.mulf %18, %28 : vector<8x1xf32>
      %32 = arith.subf %30, %31 : vector<8x1xf32>
      %c0_19 = arith.constant 0 : index
      %c0_20 = arith.constant 0 : index
      %33 = vector.load %arg10[%c0_19, %c0_20] : memref<8x1xf32, #tpu.memory_space<vmem>>, vector<8x1xf32>
      tpu.vector_store %arg10[%c0_19, %c0_20], %32 {strides = array<i32>} : memref<8x1xf32, #tpu.memory_space<vmem>>, vector<8x1xf32>,
    } else {
    }
    %c1_i32_6 = arith.constant 1 : i32
    %13 = arith.cmpi eq, %arg0, %c1_i32_6 : i32
    %14 = arith.extui %13 : i1 to i32
    %c0_i32_7 = arith.constant 0 : i32
    %15 = arith.cmpi ne, %14, %c0_i32_7 : i32
    scf.if %15 {
      %c512_i32 = arith.constant 512 : i32
      %16 = arith.muli %arg1, %c512_i32 : i32
      %17 = tpu.assume_multiple %16, 512 : i32
      %c0 = arith.constant 0 : index
      %18 = arith.index_cast %17 : i32 to index
      %19 = vector.load %arg11[%c0, %18] : memref<8x512xf32, #tpu.memory_space<vmem>>, vector<8x512xf32>
      %c0_8 = arith.constant 0 : index
      %c0_9 = arith.constant 0 : index
      %20 = vector.load %arg9[%c0_8, %c0_9] : memref<8x1xf32, #tpu.memory_space<vmem>>, vector<8x1xf32>
      %21 = vector.broadcast %20 : vector<8x1xf32> to vector<8x512xf32>
      %22 = arith.mulf %19, %21 : vector<8x512xf32>
      %c0_10 = arith.constant 0 : index
      %c0_11 = arith.constant 0 : index
      %23 = vector.load %arg10[%c0_10, %c0_11] : memref<8x1xf32, #tpu.memory_space<vmem>>, vector<8x1xf32>
      %24 = vector.broadcast %23 : vector<8x1xf32> to vector<8x512xf32>
      %25 = arith.addf %22, %24 : vector<8x512xf32>
      %cst = arith.constant 0.000000e+00 : f32
      %26 = vector.broadcast %cst : f32 to vector<8x512xf32>
      %27 = arith.maximumf %25, %26 : vector<8x512xf32>
      %c0_12 = arith.constant 0 : index
      %c0_13 = arith.constant 0 : index
      %28 = vector.load %arg6[%c0_12, %c0_13] : memref<8x512xf32, #tpu.memory_space<vmem>>, vector<8x512xf32>
      tpu.vector_store %arg6[%c0_12, %c0_13], %27 {strides = array<i32>} : memref<8x512xf32, #tpu.memory_space<vmem>>, vector<8x512xf32>,
    } else {
    }
    return
  }
  func.func @transform_0(%arg0: i32, %arg1: i32) -> (i32, i32) {
    %c0_i32 = arith.constant 0 : i32
    %c0_i32_0 = arith.constant 0 : i32
    %c0_i32_1 = arith.constant 0 : i32
    return %c0_i32, %c0_i32_0 : i32, i32
  }
  func.func @transform_1(%arg0: i32, %arg1: i32) -> (i32, i32) {
    %c0_i32 = arith.constant 0 : i32
    %c0_i32_0 = arith.constant 0 : i32
    %c0_i32_1 = arith.constant 0 : i32
    return %c0_i32, %c0_i32_0 : i32, i32
  }
  func.func @transform_2(%arg0: i32, %arg1: i32) -> (i32, i32) {
    %c1_i32 = arith.constant 1 : i32
    %0 = arith.subi %c1_i32, %arg0 : i32
    %1 = arith.muli %arg1, %0 : i32
    %c0_i32 = arith.constant 0 : i32
    %c0_i32_0 = arith.constant 0 : i32
    return %c0_i32, %1 : i32, i32
  }
  func.func @transform_3(%arg0: i32, %arg1: i32) -> (i32, i32) {
    %c0_i32 = arith.constant 0 : i32
    %c0_i32_0 = arith.constant 0 : i32
    %c0_i32_1 = arith.constant 0 : i32
    return %c0_i32, %c0_i32_0 : i32, i32
  }
  func.func @transform_4(%arg0: i32, %arg1: i32) -> (i32, i32) {
    %0 = arith.muli %arg1, %arg0 : i32
    %c0_i32 = arith.constant 0 : i32
    %c0_i32_0 = arith.constant 0 : i32
    return %c0_i32, %0 : i32, i32
  }
}

</mosaic_0001>

<llo_original>
// kernel: conv_bn_relu.1
$region0: #{conv_bn_relu.1}
  #allocation0 [shape = 'u32[]', space=smem, size = 0x4, offset = 0x4, fixed_abs, tag = 'smem constant byte address 0x4 - core index']
  #allocation1 [shape = 'u32[144,128]{1,0:T(1,128)}', space=vmem, size = 0x12000, scoped, tag = 'internal scratch']
  #allocation2 [shape = 'f32[8,1]{1,0:T(8,128)}', space=vmem, size = 0x1000, scoped, tag = 'scratch operand']
  #allocation3 [shape = 'f32[8,1]{1,0:T(8,128)}', space=vmem, size = 0x1000, scoped, tag = 'scratch operand']
  #allocation4 [shape = 'f32[8,1]{1,0:T(8,128)}', space=vmem, size = 0x1000, scoped, tag = 'scratch operand']
  #allocation5 [shape = 'f32[8,1]{1,0:T(8,128)}', space=vmem, size = 0x1000, scoped, tag = 'scratch operand']
  #allocation6 [shape = 'f32[8,512]{1,0:T(8,128)}', space=vmem, size = 0x4000, scoped, tag = 'scratch operand']
  %s0 = inlined_call_operand.vmem [shape: f32[8,1], index: 0, kind: input, shape index: {}]
  %s1 = inlined_call_operand.vmem [shape: f32[8,1], index: 1, kind: input, shape index: {}]
  %s2 = inlined_call_operand.vmem [shape: bf16[36,512], index: 2, kind: input, shape index: {}]
  %s3 = inlined_call_operand.vmem [shape: bf16[8,36], index: 3, kind: input, shape index: {}]
  %s4 = inlined_call_operand.vmem [shape: f32[8,512], index: 4, kind: output, shape index: {}]
  %s5 = sld [smem:[#allocation0]]
  $region65: #{conv_bn_relu.1} parent=0
    _
  %s7 = ssub.s32 1, %s5
  %s8 = scalar_select 0, %s7, %s5
  loop: start=0, step=1, limit=4
  $region2: #{conv_bn_relu.1} parent=0 // loop_pre_header
    _
  $region3: #{conv_bn_relu.1} parent=0 // loop_header
    %s10 = sphi 0, %s14
    %p11 = scmp.ge.s32.totalorder %s10, 4
    %s17 = sphi 0, %s29
    %s18 = sphi 0, %s25
    %s19 = sphi 0, %s17
    %s20 = sphi 0, %s18
    %s21 = sphi 0, %s19
    %s22 = sphi 0, %s20
    %s30 = sphi 0, %s30
    %s32 = sphi 0, %s30
    %s33 = sphi 0, %s32
    %s47 = sphi 0, %s33
    %s51 = sphi 0, %s51
    %s53 = sphi 0, %s51
    %s54 = sphi 0, %s53
    %s68 = sphi 0, %s54
    %s78 = sphi 0, %s80
    %s81 = sphi 0, %s78
    %s82 = sphi 0, %s81
    %s98 = sphi 0, %s82
    %s102 = sphi 0, %s102
    %s104 = sphi 0, %s102
    %s105 = sphi 0, %s104
    %s119 = sphi 0, %s105
    %s127 = sphi 0, %s129
    %s130 = sphi 0, %s127
    %s131 = sphi 0, %s130
    %s147 = sphi 0, %s131
  $region4: #{conv_bn_relu.1} parent=0 // loop_header_branch
    %13 = sbr.rel (%p11) target = $region8
  $region5: #{conv_bn_relu.1} parent=0 // loop_body
    %s15 = ssub.s32 %s10, 1
    %s16 = ssub.s32 %s10, 2
    %s23 = sadd.s32 1, %s18
    %p24 = scmp.ge.s32.totalorder %s23, 1
    %s25 = scalar_select %p24, 0, %s23
    %s26 = sadd.s32 1, %s17
    %s27 = scalar_select %p24, %s26, %s17
    %p28 = scmp.ge.s32.totalorder %s27, 2
    %s29 = scalar_select %p28, 0, %s27
    %s31 = sadd.s32 %s30, 1
    %p34 = scmp.eq.s32.totalorder %s10, 1
    %p35 = scmp.ne.s32.totalorder %s30, %s32
    %p36 = scmp.eq.s32.totalorder %s10, 0
    %p37 = por %p35, %p36
    %p38 = scmp.ne.s32.totalorder %s30, %s32
    %p39 = scmp.eq.s32.totalorder %s15, 1
    %p40 = por %p38, %p39
    %p41 = scmp.ne.s32.totalorder %s32, %s33
    %p42 = scmp.eq.s32.totalorder %s15, 0
    %p43 = por %p41, %p42
    %p44 = scmp.ne.s32.totalorder %s32, %s33
    %p45 = scmp.eq.s32.totalorder %s16, 1
    %p46 = por %p44, %p45
    %p48 = scmp.ne.s32.totalorder %s33, %s47
    %p49 = scmp.eq.s32.totalorder %s16, 0
    %p50 = por %p48, %p49
    %s52 = sadd.s32 %s51, 1
    %p55 = scmp.eq.s32.totalorder %s10, 1
    %p56 = scmp.ne.s32.totalorder %s51, %s53
    %p57 = scmp.eq.s32.totalorder %s10, 0
    %p58 = por %p56, %p57
    %p59 = scmp.ne.s32.totalorder %s51, %s53
    %p60 = scmp.eq.s32.totalorder %s15, 1
    %p61 = por %p59, %p60
    %p62 = scmp.ne.s32.totalorder %s53, %s54
    %p63 = scmp.eq.s32.totalorder %s15, 0
    %p64 = por %p62, %p63
    %p65 = scmp.ne.s32.totalorder %s53, %s54
    %p66 = scmp.eq.s32.totalorder %s16, 1
    %p67 = por %p65, %p66
    %p69 = scmp.ne.s32.totalorder %s54, %s68
    %p70 = scmp.eq.s32.totalorder %s16, 0
    %p71 = por %p69, %p70
    %s72 = ssub.s32 1, %s17
    %s73 = smul.u32 %s18, %s72
    %s74 = ssub.s32 1, %s29
    %s75 = smul.u32 %s25, %s74
    %s76 = ssub.s32 %s73, %s75
    %p77 = scmp.eq.s32.totalorder %s76, 0
    %s79 = sadd.s32 %s78, 1
    %s80 = scalar_select %p77, %s78, %s79
    %p83 = pneg %p77
    %p84 = scmp.eq.s32.totalorder %s10, 1
    %p85 = por %p83, %p84
    %p86 = scmp.ne.s32.totalorder %s78, %s81
    %p87 = scmp.eq.s32.totalorder %s10, 0
    %p88 = por %p86, %p87
    %p89 = scmp.ne.s32.totalorder %s78, %s81
    %p90 = scmp.eq.s32.totalorder %s15, 1
    %p91 = por %p89, %p90
    %p92 = scmp.ne.s32.totalorder %s81, %s82
    %p93 = scmp.eq.s32.totalorder %s15, 0
    %p94 = por %p92, %p93
    %p95 = scmp.ne.s32.totalorder %s81, %s82
    %p96 = scmp.eq.s32.totalorder %s16, 1
    %p97 = por %p95, %p96
    %p99 = scmp.ne.s32.totalorder %s82, %s98
    %p100 = scmp.eq.s32.totalorder %s16, 0
    %p101 = por %p99, %p100
    %s103 = sadd.s32 %s102, 1
    %p106 = scmp.eq.s32.totalorder %s10, 1
    %p107 = scmp.ne.s32.totalorder %s102, %s104
    %p108 = scmp.eq.s32.totalorder %s10, 0
    %p109 = por %p107, %p108
    %p110 = scmp.ne.s32.totalorder %s102, %s104
    %p111 = scmp.eq.s32.totalorder %s15, 1
    %p112 = por %p110, %p111
    %p113 = scmp.ne.s32.totalorder %s104, %s105
    %p114 = scmp.eq.s32.totalorder %s15, 0
    %p115 = por %p113, %p114
    %p116 = scmp.ne.s32.totalorder %s104, %s105
    %p117 = scmp.eq.s32.totalorder %s16, 1
    %p118 = por %p116, %p117
    %p120 = scmp.ne.s32.totalorder %s105, %s119
    %p121 = scmp.eq.s32.totalorder %s16, 0
    %p122 = por %p120, %p121
    %s123 = smul.u32 %s18, %s17
    %s124 = smul.u32 %s25, %s29
    %s125 = ssub.s32 %s123, %s124
    %p126 = scmp.eq.s32.totalorder %s125, 0
    %s128 = sadd.s32 %s127, 1
    %s129 = scalar_select %p126, %s127, %s128
    %p132 = pneg %p126
    %p133 = scmp.eq.s32.totalorder %s10, 1
    %p134 = por %p132, %p133
    %p135 = scmp.ne.s32.totalorder %s127, %s130
    %p136 = scmp.eq.s32.totalorder %s10, 0
    %p137 = por %p135, %p136
    %p138 = scmp.ne.s32.totalorder %s127, %s130
    %p139 = scmp.eq.s32.totalorder %s15, 1
    %p140 = por %p138, %p139
    %p141 = scmp.ne.s32.totalorder %s130, %s131
    %p142 = scmp.eq.s32.totalorder %s15, 0
    %p143 = por %p141, %p142
    %p144 = scmp.ne.s32.totalorder %s130, %s131
    %p145 = scmp.eq.s32.totalorder %s16, 1
    %p146 = por %p144, %p145
    %p148 = scmp.ne.s32.totalorder %s131, %s147
    %p149 = scmp.eq.s32.totalorder %s16, 0
    %p150 = por %p148, %p149
    %p151 = scmp.le.s32.totalorder 1, %s10
    %p152 = scmp.lt.s32.totalorder %s10, 3
    %p153 = pnand %p151, %p152
    %p154 = pneg %p153
    // Predicated region
    $region9: #{conv_bn_relu.1} parent=5 // pred_check
      _
    $region10: #{conv_bn_relu.1} parent=5 // pred_check_branch
      %156 = sbr.rel (%p153) target = $region12
    $region11: #{conv_bn_relu.1} parent=5 // pred_region
      %s157 = ssub.s32 %s10, 1
      // Predicated region
      $region13: #{conv_bn_relu.1} parent=11 // pred_check
        %p158 = pneg %p43
      $region14: #{conv_bn_relu.1} parent=11 // pred_check_branch
        %160 = sbr.rel (%p158) target = $region16
      $region15: #{conv_bn_relu.1} parent=11 // pred_region
        _
      $region16: #{conv_bn_relu.1} parent=11 // pred_fallthru
        _
      // Predicated region
      $region17: #{conv_bn_relu.1} parent=11 // pred_check
        %p161 = pneg %p64
      $region18: #{conv_bn_relu.1} parent=11 // pred_check_branch
        %163 = sbr.rel (%p161) target = $region20
      $region19: #{conv_bn_relu.1} parent=11 // pred_region
        _
      $region20: #{conv_bn_relu.1} parent=11 // pred_fallthru
        _
      // Predicated region
      $region21: #{conv_bn_relu.1} parent=11 // pred_check
        %p164 = pneg %p115
      $region22: #{conv_bn_relu.1} parent=11 // pred_check_branch
        %166 = sbr.rel (%p164) target = $region24
      $region23: #{conv_bn_relu.1} parent=11 // pred_region
        _
      $region24: #{conv_bn_relu.1} parent=11 // pred_fallthru
        _
    $region12: #{conv_bn_relu.1} parent=5 // pred_fallthru
      _
    %p167 = scmp.lt.s32.totalorder %s10, 2
    // Predicated region
    $region25: #{conv_bn_relu.1} parent=5 // pred_check
      %p168 = pneg %p167
    $region26: #{conv_bn_relu.1} parent=5 // pred_check_branch
      %170 = sbr.rel (%p168) target = $region28
    $region27: #{conv_bn_relu.1} parent=5 // pred_region
      // Predicated region
      $region29: #{conv_bn_relu.1} parent=27 // pred_check
        %p171 = pneg %p88
      $region30: #{conv_bn_relu.1} parent=27 // pred_check_branch
        %173 = sbr.rel (%p171) target = $region32
      $region31: #{conv_bn_relu.1} parent=27 // pred_region
        %s174 = ssub.s32 1, %s17
        %s175 = smul.u32 %s18, %s174
        %s176 = smul.u32 4, %s175
        %p177 = scmp.lt.s32.totalorder %s176, 3
        %s178 = scalar_select %p177, %s176, 3
        %s179 = smul.addr %s178, 4
        %s180 = scalar_lea.vmem %s2, %s179
        %s181 = ssub.s32 1, %s17
        %s182 = smul.u32 %s18, %s181
        %s183 = smul.u32 4, %s182
      $region32: #{conv_bn_relu.1} parent=27 // pred_fallthru
        _
    $region28: #{conv_bn_relu.1} parent=5 // pred_fallthru
      _
    %p184 = scmp.le.s32.totalorder 1, %s10
    %p185 = scmp.lt.s32.totalorder %s10, 3
    %p186 = pnand %p184, %p185
    %p187 = pneg %p186
    // Predicated region
    $region33: #{conv_bn_relu.1} parent=5 // pred_check
      _
    $region34: #{conv_bn_relu.1} parent=5 // pred_check_branch
      %189 = sbr.rel (%p186) target = $region36
    $region35: #{conv_bn_relu.1} parent=5 // pred_region
      %s190 = ssub.s32 %s10, 1
      %p191 = pneg %p43
      %p192 = pneg %p40
      %p193 = pneg %p64
      %p194 = pneg %p61
      %s195 = ssub.s32 1, %s19
      %s196 = smul.u32 %s20, %s195
      %s197 = smul.u32 4, %s196
      %p198 = scmp.lt.s32.totalorder %s197, 3
      %s199 = scalar_select %p198, %s197, 3
      %s200 = smul.addr %s199, 4
      %s201 = scalar_lea.vmem %s2, %s200
      %p202 = pneg %p94
      %p203 = pneg %p91
      %p204 = pneg %p115
      %p205 = pneg %p112
      %p206 = pneg %p143
      %p207 = pneg %p140
      %s208 = smul.u32 %s20, %s19
      %s209 = smul.u32 4, %s208
      %p210 = scmp.lt.s32.totalorder %s209, 3
      %s211 = scalar_select %p210, %s209, 3
      %s212 = smul.addr %s211, 8
      %s213 = scalar_lea.vmem %s4, %s212
      %s214 = ssub.s32 1, %s19
      %s215 = smul.u32 %s20, %s214
      %s216 = smul.u32 4, %s215
      %p217 = scmp.lt.s32.totalorder %s216, 3
      %s218 = scalar_select %p217, %s216, 3
      %s219 = smul.addr %s218, 4
      %s220 = scalar_lea.vmem %s2, %s219
      %s221 = ssub.s32 1, %s19
      %s222 = smul.u32 %s20, %s221
      %s223 = smul.u32 4, %s222
      %s224 = smul.u32 %s20, %s19
      %s225 = smul.u32 4, %s224
      %p226 = scmp.lt.s32.totalorder %s225, 3
      %s227 = scalar_select %p226, %s225, 3
      %s228 = smul.addr %s227, 8
      %s229 = scalar_lea.vmem %s4, %s228
      %s230 = smul.u32 %s20, %s19
      %s231 = smul.u32 4, %s230
      %p233 = scmp.eq.s32.totalorder %s19, 0
      %p234 = scmp.eq.s32.totalorder %s20, 0
      %p235 = pnand %p233, %p234
      %p236 = pneg %p235
      // Predicated region
      $region37: #{conv_bn_relu.1} parent=35 // pred_check
        _
      $region38: #{conv_bn_relu.1} parent=35 // pred_check_branch
        %238 = sbr.rel (%p235) target = $region40
      $region39: #{conv_bn_relu.1} parent=35 // pred_region
        %vm239 = vcmask 7168
        %240 = vst.msk [vmem:[#allocation2] sm:$0xff] %vm239, 0.0
        %241 = vst.msk [vmem:[#allocation3] sm:$0xff] %vm239, 0.0
      $region40: #{conv_bn_relu.1} parent=35 // pred_fallthru
        _
      // Predicated region
      $region41: #{conv_bn_relu.1} parent=35 // pred_check
        %p242 = pneg %p233
      $region42: #{conv_bn_relu.1} parent=35 // pred_check_branch
        %244 = sbr.rel (%p242) target = $region44
      $region43: #{conv_bn_relu.1} parent=35 // pred_region
        %v245 = vld [vmem:[%s3] sm:$0xf]
        %v246 = vld [vmem:[%s220] sm:$0xff]
        %v247 = vld [vmem:[%s220 + $0x8] sm:$0xff]
        %v248 = vld [vmem:[%s220 + $0x10] sm:$0xff]
        %v249 = vld [vmem:[%s220 + $0x18] sm:$0xff]
        %v250 = vld [vmem:[%s220 + $0x20] sm:$0xff]
        %v251 = vld [vmem:[%s220 + $0x28] sm:$0xff]
        %v252 = vld [vmem:[%s220 + $0x30] sm:$0xff]
        %v253 = vld [vmem:[%s220 + $0x38] sm:$0xff]
        %v254 = vld [vmem:[%s220 + $0x40] sm:$0x33]
        %v255 = vld [vmem:[%s220 + $0x48] sm:$0x33]
        %v266 = vunpack.c.l.b16 %v246
        %v267 = vunpack.c.h.b16 %v246
        %v268 = vunpack.c.l.b16 %v247
        %v269 = vunpack.c.h.b16 %v247
        %v270 = vunpack.c.l.b16 %v248
        %v271 = vunpack.c.h.b16 %v248
        %v272 = vunpack.c.l.b16 %v249
        %v273 = vunpack.c.h.b16 %v249
        %v274 = vunpack.c.l.b16 %v250
        %v275 = vunpack.c.h.b16 %v250
        %v276 = vunpack.c.l.b16 %v251
        %v277 = vunpack.c.h.b16 %v251
        %v278 = vunpack.c.l.b16 %v252
        %v279 = vunpack.c.h.b16 %v252
        %v280 = vunpack.c.l.b16 %v253
        %v281 = vunpack.c.h.b16 %v253
        %v282 = vunpack.c.l.b16 %v254
        %v283 = vunpack.c.h.b16 %v254
        %v284 = vunpack.c.l.b16 %v255
        %v285 = vunpack.c.h.b16 %v255
        %v286 = vpack.c.b16 %v270, %v266
        %v287 = vpack.c.b16 %v271, %v267
        %v288 = vpack.c.b16 %v272, %v268
        %v289 = vpack.c.b16 %v273, %v269
        %v290 = vpack.c.b16 %v278, %v274
        %v291 = vpack.c.b16 %v279, %v275
        %v292 = vpack.c.b16 %v280, %v276
        %v293 = vpack.c.b16 %v281, %v277
        %v294 = vpack.c.b16 %v282, %v282
        %v295 = vpack.c.b16 %v283, %v283
        %v296 = vpack.c.b16 %v284, %v284
        %v297 = vpack.c.b16 %v285, %v285
        %vm306 = vcmask 293888
        %v308 = vsel %vm306, %v245, 0
        %vm310 = vcmask 1041408
        %v312 = vsel %vm310, %v294, 0
        %v315 = vsel %vm310, %v295, 0
        %v318 = vsel %vm310, %v296, 0
        %v321 = vsel %vm310, %v297, 0
        %323 = vmatprep.subr.bf16.mxu0 %v287
        %324 = vmatpush1.bf16.msra.mxu0 %v286
        %325 = vmatprep.subr.bf16.mxu0 %v291
        %326 = vmatpush1.bf16.msra.mxu0 %v290
        %327 = vmatprep.subr.bf16.mxu0 %v315
        %328 = vmatpush1.bf16.msra.mxu0 %v312
        %329 = vmatprep.subr.bf16.mxu0 0
        %330 = vmatpush1.bf16.msra.mxu0 0
        %331 = vmatprep.subr.bf16.mxu0 0
        %332 = vmatpush1.bf16.msra.mxu0 0
        %333 = vmatprep.subr.bf16.mxu0 0
        %334 = vmatpush1.bf16.msra.mxu0 0
        %335 = vmatprep.subr.bf16.mxu0 0
        %336 = vmatpush1.bf16.msra.mxu0 0
        %337 = vmatprep.subr.bf16.mxu0 0
        %338 = vmatpush1.bf16.msra.mxu0 0
        %339 = vmatprep.subr.bf16.mxu0 0
        %340 = vmatpush1.bf16.msra.mxu0 0
        %341 = vmatprep.subr.bf16.mxu0 0
        %342 = vmatpush1.bf16.msra.mxu0 0
        %343 = vmatprep.subr.bf16.mxu0 0
        %344 = vmatpush1.bf16.msra.mxu0 0
        %345 = vmatprep.subr.bf16.mxu0 0
        %346 = vmatpush1.bf16.msra.mxu0 0
        %347 = vmatprep.subr.bf16.mxu0 0
        %348 = vmatpush1.bf16.msra.mxu0 0
        %349 = vmatprep.subr.bf16.mxu0 0
        %350 = vmatpush1.bf16.msra.mxu0 0
        %351 = vmatprep.subr.bf16.mxu0 0
        %352 = vmatpush1.bf16.msra.mxu0 0
        %353 = vmatprep.subr.bf16.mxu0 0
        %354 = vmatpush1.bf16.msra.mxu0 0
        %355 = vmatprep.mubr.bf16.mxu0 0
        %356 = vmatmul.mubr.bf16.gmra.mrb[0].mxu0 %v308
        %v357 = vpop.f32.mrb[0].mxu0
        %v358 = vadd.f32 0.0, %v357
        %v359 = vpop.f32.mrb[0].mxu0
        %v360 = vadd.f32 0.0, %v359
        %v361 = vpop.f32.mrb[0].mxu0
        %v362 = vpop.f32.mrb[0].mxu0
        %363 = vdwg.mxu0
        %364 = vmatprep.subr.bf16.mxu0 %v289
        %365 = vmatpush1.bf16.msra.mxu0 %v288
        %366 = vmatprep.subr.bf16.mxu0 %v293
        %367 = vmatpush1.bf16.msra.mxu0 %v292
        %368 = vmatprep.subr.bf16.mxu0 %v321
        %369 = vmatpush1.bf16.msra.mxu0 %v318
        %370 = vmatprep.subr.bf16.mxu0 0
        %371 = vmatpush1.bf16.msra.mxu0 0
        %372 = vmatprep.subr.bf16.mxu0 0
        %373 = vmatpush1.bf16.msra.mxu0 0
        %374 = vmatprep.subr.bf16.mxu0 0
        %375 = vmatpush1.bf16.msra.mxu0 0
        %376 = vmatprep.subr.bf16.mxu0 0
        %377 = vmatpush1.bf16.msra.mxu0 0
        %378 = vmatprep.subr.bf16.mxu0 0
        %379 = vmatpush1.bf16.msra.mxu0 0
        %380 = vmatprep.subr.bf16.mxu0 0
        %381 = vmatpush1.bf16.msra.mxu0 0
        %382 = vmatprep.subr.bf16.mxu0 0
        %383 = vmatpush1.bf16.msra.mxu0 0
        %384 = vmatprep.subr.bf16.mxu0 0
        %385 = vmatpush1.bf16.msra.mxu0 0
        %386 = vmatprep.subr.bf16.mxu0 0
        %387 = vmatpush1.bf16.msra.mxu0 0
        %388 = vmatprep.subr.bf16.mxu0 0
        %389 = vmatpush1.bf16.msra.mxu0 0
        %390 = vmatprep.subr.bf16.mxu0 0
        %391 = vmatpush1.bf16.msra.mxu0 0
        %392 = vmatprep.subr.bf16.mxu0 0
        %393 = vmatpush1.bf16.msra.mxu0 0
        %394 = vmatprep.subr.bf16.mxu0 0
        %395 = vmatpush1.bf16.msra.mxu0 0
        %396 = vmatprep.mubr.bf16.mxu0 0
        %397 = vmatmul.mubr.bf16.gmra.mrb[0].mxu0 %v308
        %v398 = vpop.f32.mrb[0].mxu0
        %v399 = vadd.f32 0.0, %v398
        %v400 = vpop.f32.mrb[0].mxu0
        %v401 = vadd.f32 0.0, %v400
        %v402 = vpop.f32.mrb[0].mxu0
        %v403 = vpop.f32.mrb[0].mxu0
        %404 = vdwg.mxu0
        %v405 = vld [vmem:[#allocation2] sm:$0xff]
        %v406 = vadd.f32 %v358, %v360
        %v407 = vadd.f32 %v406, %v399
        %v408 = vadd.f32 %v407, %v401
        %409 = vadd.xlane.f32.xlu0 %v408
        %v410 = vpop.xlane.xlu0 %409
        %v411 = vadd.f32 %v405, %v410
        %vm412 = vcmask 7168
        %413 = vst.msk [vmem:[#allocation2] sm:$0xff] %vm412, %v411
        %v414 = vld [vmem:[#allocation3] sm:$0xff]
        %v415 = vmul.f32 %v358, %v358
        %v416 = vmul.f32 %v360, %v360
        %v417 = vmul.f32 %v399, %v399
        %v418 = vmul.f32 %v401, %v401
        %v419 = vadd.f32 %v415, %v416
        %v420 = vadd.f32 %v419, %v417
        %v421 = vadd.f32 %v420, %v418
        %422 = vadd.xlane.f32.xlu0 %v421
        %v423 = vpop.xlane.xlu0 %422
        %v424 = vadd.f32 %v414, %v423
        %425 = vst.msk [vmem:[#allocation3] sm:$0xff] %vm412, %v424
        %s426 = smul.u32 %s20, 512
        %s427 = sshra.s32 %s426, 7
        %s428 = sand.u32 %s426, 127
        %s429 = smul.addr %s427, 8
        %s430 = scalar_lea.vmem [#allocation6], %s429
        %431 = vst [vmem:[%s430] sm:$0xff] %v358
        %432 = vst [vmem:[%s430 + $0x8] sm:$0xff] %v360
        %433 = vst [vmem:[%s430 + $0x10] sm:$0xff] %v399
        %434 = vst [vmem:[%s430 + $0x18] sm:$0xff] %v401
      $region44: #{conv_bn_relu.1} parent=35 // pred_fallthru
        _
      %p435 = scmp.eq.s32.totalorder %s19, 1
      %p436 = pnand %p435, %p234
      %p437 = pneg %p436
      // Predicated region
      $region45: #{conv_bn_relu.1} parent=35 // pred_check
        _
      $region46: #{conv_bn_relu.1} parent=35 // pred_check_branch
        %439 = sbr.rel (%p436) target = $region48
      $region47: #{conv_bn_relu.1} parent=35 // pred_region
        %v440 = vld [vmem:[#allocation2] sm:$0xff]
        %v441 = vmul.f32 %v440, 0.001953125
        %v442 = vld [vmem:[#allocation3] sm:$0xff]
        %v443 = vmul.f32 %v442, 0.001953125
        %v444 = vmul.f32 %v441, %v441
        %v445 = vsub.f32 %v443, %v444
        %v446 = vadd.f32 %v445, 1e-05
        %v447 = vrsqrt.pop %v446
        %v448 = vld [vmem:[%s0] sm:$0xff]
        %v449 = vmul.f32 %v448, %v447
        %vm450 = vcmask 7168
        %451 = vst.msk [vmem:[#allocation4] sm:$0xff] %vm450, %v449
        %v452 = vld [vmem:[%s1] sm:$0xff]
        %v453 = vmul.f32 %v441, %v449
        %v454 = vsub.f32 %v452, %v453
        %455 = vst.msk [vmem:[#allocation5] sm:$0xff] %vm450, %v454
      $region48: #{conv_bn_relu.1} parent=35 // pred_fallthru
        _
      // Predicated region
      $region49: #{conv_bn_relu.1} parent=35 // pred_check
        %p456 = pneg %p435
      $region50: #{conv_bn_relu.1} parent=35 // pred_check_branch
        %458 = sbr.rel (%p456) target = $region52
      $region51: #{conv_bn_relu.1} parent=35 // pred_region
        %s459 = smul.u32 %s20, 512
        %s460 = sshra.s32 %s459, 7
        %s461 = sand.u32 %s459, 127
        %s462 = smul.addr %s460, 8
        %s463 = scalar_lea.vmem [#allocation6], %s462
        %v464 = vld [vmem:[%s463] sm:$0xff]
        %v465 = vld [vmem:[%s463 + $0x8] sm:$0xff]
        %v466 = vld [vmem:[%s463 + $0x10] sm:$0xff]
        %v467 = vld [vmem:[%s463 + $0x18] sm:$0xff]
        %v468 = vld [vmem:[#allocation4] sm:$0xff]
        %470 = vset.pattern.permute.xlu0 0
        %471 = vperm.xlu0 %470, %v468
        %v472 = vpop.permute.xlu0 %471
        %v474 = vmul.f32 %v464, %v472
        %v475 = vmul.f32 %v465, %v472
        %v476 = vmul.f32 %v466, %v472
        %v477 = vmul.f32 %v467, %v472
        %v478 = vld [vmem:[#allocation5] sm:$0xff]
        %480 = vset.pattern.permute.xlu0 0
        %481 = vperm.xlu0 %480, %v478
        %v482 = vpop.permute.xlu0 %481
        %v484 = vadd.f32 %v474, %v482
        %v485 = vadd.f32 %v475, %v482
        %v486 = vadd.f32 %v476, %v482
        %v487 = vadd.f32 %v477, %v482
        %v488 = vmax.f32 %v484, 0.0
        %v489 = vmax.f32 %v485, 0.0
        %v490 = vmax.f32 %v486, 0.0
        %v491 = vmax.f32 %v487, 0.0
        %492 = vst [vmem:[%s229] sm:$0xff] %v488
        %493 = vst [vmem:[%s229 + $0x8] sm:$0xff] %v489
        %494 = vst [vmem:[%s229 + $0x10] sm:$0xff] %v490
        %495 = vst [vmem:[%s229 + $0x18] sm:$0xff] %v491
      $region52: #{conv_bn_relu.1} parent=35 // pred_fallthru
        _
      %s496 = smul.u32 %s20, %s19
      %s497 = smul.u32 4, %s496
      %p498 = scmp.lt.s32.totalorder %s497, 3
      %s499 = scalar_select %p498, %s497, 3
      %s500 = smul.addr %s499, 8
      %s501 = scalar_lea.vmem %s4, %s500
      // Predicated region
      $region53: #{conv_bn_relu.1} parent=35 // pred_check
        %p502 = pneg %p140
      $region54: #{conv_bn_relu.1} parent=35 // pred_check_branch
        %504 = sbr.rel (%p502) target = $region56
      $region55: #{conv_bn_relu.1} parent=35 // pred_region
        %s505 = smul.u32 %s20, %s19
        %s506 = smul.u32 4, %s505
      $region56: #{conv_bn_relu.1} parent=35 // pred_fallthru
        _
    $region36: #{conv_bn_relu.1} parent=5 // pred_fallthru
      _
    %p507 = scmp.le.s32.totalorder 2, %s10
    // Predicated region
    $region57: #{conv_bn_relu.1} parent=5 // pred_check
      %p508 = pneg %p507
    $region58: #{conv_bn_relu.1} parent=5 // pred_check_branch
      %510 = sbr.rel (%p508) target = $region60
    $region59: #{conv_bn_relu.1} parent=5 // pred_region
      %s511 = ssub.s32 %s10, 2
      // Predicated region
      $region61: #{conv_bn_relu.1} parent=59 // pred_check
        %p512 = pneg %p146
      $region62: #{conv_bn_relu.1} parent=59 // pred_check_branch
        %514 = sbr.rel (%p512) target = $region64
      $region63: #{conv_bn_relu.1} parent=59 // pred_region
        %s515 = smul.u32 %s22, %s21
        %s516 = smul.u32 4, %s515
        %p517 = scmp.lt.s32.totalorder %s516, 3
        %s518 = scalar_select %p517, %s516, 3
        %s519 = smul.addr %s518, 8
        %s520 = scalar_lea.vmem %s4, %s519
      $region64: #{conv_bn_relu.1} parent=59 // pred_fallthru
        _
    $region60: #{conv_bn_relu.1} parent=5 // pred_fallthru
      _
  $region6: #{conv_bn_relu.1} parent=0 // loop_footer
    %s14 = sadd.s32 1, %s10
  $region7: #{conv_bn_relu.1} parent=0 // loop_footer_branch
    %9 = sbr.rel target = $region3
  $region8: #{conv_bn_relu.1} parent=0 // loop_exit
    _

</llo_original>
